<compile_context>
chip_gen: v7x
topology: tpu7x:2x2x1
jax: 0.10.0
libtpu: 0.0.40
codegen_flags: <defaults>
</compile_context>

<pallas_src>
import functools

import numpy as np
import jax
import jax.numpy as jnp
from jax.experimental import pallas as pl
from jax.experimental.pallas import tpu as pltpu

_LANE = 128
_SUBLANE = 8


def _round_up(x, m):
    return (x + m - 1) // m * m


def _softsplat_kernel(base_ref, tgt_ref, dst_ref, out_ref, acc_ref, *,
                      c_real, normalize):
    """One (batch, dst-tile, src-tile) block of the splatted output.

    base_ref: (1, C_pad, TK)  pre-scaled channels [inp*f ; f ; 0-pad]
    tgt_ref : (1, TK, 2)      per-src target coords (x+flow_x, y+flow_y)
    dst_ref : (1, 2, TD)      precomputed dst x / y for this dst tile
    out_ref : (1, C_pad, TD)
    acc_ref : (C_pad, TD) f32 scratch accumulator (resident across k)
    """
    k = pl.program_id(2)

    @pl.when(k == 0)
    def _():
        acc_ref[...] = jnp.zeros_like(acc_ref)

    aug = base_ref[0]                        # (C_pad, TK)
    tgt = tgt_ref[0]                         # (TK, 2): src on sublanes
    ox = tgt[:, 0:1]                         # (TK, 1)
    oy = tgt[:, 1:2]
    dstc = dst_ref[0]                        # (2, TD)
    dstx = dstc[0:1, :]                      # (1, TD)
    dsty = dstc[1:2, :]

    # Separable bilinear hats: exact corner weights, implicit bounds check.
    # TODO(synk): exploit dst periodicity (period W) to reuse wx/wy panels and
    # roughly halve the per-slab VPU work (needs TD % W == 0 handling).
    wx = jnp.maximum(1.0 - jnp.abs(ox - dstx), 0.0)      # (TK, TD)
    wy = jnp.maximum(1.0 - jnp.abs(oy - dsty), 0.0)      # (TK, TD)
    s = wx * wy

    # splat = one standard (non-transposed) MXU contraction, accumulated.
    acc_ref[...] += jnp.dot(aug, s, preferred_element_type=jnp.float32)

    @pl.when(k == pl.num_programs(2) - 1)
    def _():
        acc = acc_ref[...]
        if normalize:
            den = acc[c_real:c_real + 1, :] + 1e-7       # splatted ones/metric
            r = pl.reciprocal(den, approx=True)          # EUP slot
            r = r * (2.0 - den * r)                      # 1 Newton step
            out_ref[0] = acc * r    # den/padded rows are junk, sliced later
        else:
            out_ref[0] = acc


def softsplat(ten_input, ten_flow, ten_metric, str_type, *,
              tile_dst=512, tile_src=512):
    """JAX/Pallas equivalent of ModuleSoftsplat(strType).forward(...).

    ten_input:  (B, C, H, W) float32
    ten_flow:   (B, 2, H, W) float32
    ten_metric: (B, 1, H, W) float32 or None (for 'summation'/'average')
    """
    assert str_type in ("summation", "average", "linear", "softmax")
    assert ten_metric is None or ten_metric.shape[1] == 1
    B, C, H, W = ten_input.shape
    assert ten_flow.shape == (B, 2, H, W)
    N = H * W
    normalize = str_type != "summation"
    needs_metric = str_type in ("linear", "softmax")
    assert (not needs_metric) or (ten_metric is not None)

    c_aug = C + (1 if normalize else 0)
    c_pad = _round_up(c_aug, _SUBLANE)

    # ---- VMEM budget & tile sizes (generation-aware) -----------------------
    try:
        vmem_cap = int(pltpu.get_tpu_info().vmem_capacity_bytes)
    except Exception:
        vmem_cap = 64 * 1024 * 1024
    vmem_limit = max(32 * 1024 * 1024,
                     min(int(vmem_cap * 0.7), 100 * 1024 * 1024))

    td = min(_round_up(max(tile_dst, _LANE), _LANE), _round_up(N, _LANE))
    tk = min(_round_up(max(tile_src, _LANE), _LANE), _round_up(N, _LANE))

    def _ws_bytes(tk_, td_):
        # double-buffered inputs + slab temporaries + acc + output blocks, f32
        return 4 * (2 * c_pad * tk_ + 2 * tk_ * _LANE + 3 * tk_ * td_
                    + 3 * c_pad * td_ + 4 * td_)

    while _ws_bytes(tk, td) > vmem_limit // 2 and (tk > _LANE or td > _LANE):
        if tk >= td and tk > _LANE:
            tk = max(_LANE, (tk // 2) // _LANE * _LANE)
        else:
            td = max(_LANE, (td // 2) // _LANE * _LANE)

    # decoupled src / dst padding
    n_src_pad = _round_up(N, tk)
    n_dst_pad = _round_up(N, td)

    f32 = jnp.float32
    inp = ten_input.astype(f32).reshape(B, C, N)
    flow = ten_flow.astype(f32).reshape(B, 2, N)

    # ---- channel augmentation done ONCE in the wrapper ---------------------
    if str_type == "summation":
        chans = [inp]
    elif str_type == "average":
        chans = [inp, jnp.ones((B, 1, N), f32)]
    elif str_type == "linear":
        met = ten_metric.astype(f32).reshape(B, 1, N)
        chans = [inp * met, met]
    else:  # softmax
        met = jnp.exp(ten_metric.astype(f32).reshape(B, 1, N))
        chans = [inp * met, met]
    base = jnp.concatenate(chans, axis=1)
    if c_pad > c_aug:
        base = jnp.pad(base, ((0, 0), (0, c_pad - c_aug), (0, 0)))
    if n_src_pad > N:
        base = jnp.pad(base, ((0, 0), (0, 0), (0, n_src_pad - N)))

    # Per-source target coordinates, (B, N_src_pad, 2): src on sublanes.
    gx = jnp.tile(jnp.arange(W, dtype=f32), H)            # (N,) x of each src
    gy = jnp.repeat(jnp.arange(H, dtype=f32), W)          # (N,) y of each src
    tgt = jnp.stack([gx[None] + flow[:, 0], gy[None] + flow[:, 1]], axis=-1)
    if n_src_pad > N:   # padded sources aim far away -> zero splat weight
        tgt = jnp.pad(tgt, ((0, 0), (0, n_src_pad - N), (0, 0)),
                      constant_values=-1e4)

    # Precomputed destination coords: (1, 2, N_dst_pad); padded dsts far away.
    didx = jnp.arange(n_dst_pad, dtype=jnp.int32)
    valid = didx < N
    dx = jnp.where(valid, (didx % W).astype(f32), 1e4)
    dy = jnp.where(valid, (didx // W).astype(f32), 1e4)
    dstc = jnp.stack([dx, dy], axis=0)[None]               # (1, 2, n_dst_pad)

    kernel = functools.partial(_softsplat_kernel, c_real=C,
                               normalize=normalize)

    out = pl.pallas_call(
        kernel,
        out_shape=jax.ShapeDtypeStruct((B, c_pad, n_dst_pad), f32),
        grid=(B, n_dst_pad // td, n_src_pad // tk),
        in_specs=[
            pl.BlockSpec((1, c_pad, tk), lambda b, t, k: (b, 0, k)),
            pl.BlockSpec((1, tk, 2), lambda b, t, k: (b, k, 0)),
            pl.BlockSpec((1, 2, td), lambda b, t, k: (0, 0, t)),
        ],
        out_specs=pl.BlockSpec((1, c_pad, td), lambda b, t, k: (b, 0, t)),
        scratch_shapes=[pltpu.VMEM((c_pad, td), f32)],
        compiler_params=pltpu.CompilerParams(
            dimension_semantics=("parallel", "parallel", "arbitrary"),
            vmem_limit_bytes=vmem_limit),
    )(base, tgt, dstc)

    return out[:, :C, :N].reshape(B, C, H, W)


def reference_softsplat(inp, flow, metric, str_type):
    """Pure-numpy reference matching the CUDA kernel semantics."""
    inp = np.asarray(inp, np.float64)
    flow = np.asarray(flow, np.float64)
    B, C, H, W = inp.shape
    if str_type == "average":
        aug = np.concatenate([inp, np.ones((B, 1, H, W))], 1)
    elif str_type == "linear":
        aug = np.concatenate([inp * np.asarray(metric, np.float64),
                              np.asarray(metric, np.float64)], 1)
    elif str_type == "softmax":
        m = np.exp(np.asarray(metric, np.float64))
        aug = np.concatenate([inp * m, m], 1)
    else:
        aug = inp
    Ca = aug.shape[1]
    out = np.zeros((B, Ca, H, W))
    for b in range(B):
        for y in range(H):
            for x in range(W):
                ox = x + flow[b, 0, y, x]
                oy = y + flow[b, 1, y, x]
                nwx = int(np.floor(ox))
                nwy = int(np.floor(oy))
                ax = ox - nwx
                ay = oy - nwy
                corners = [(nwx, nwy, (1 - ax) * (1 - ay)),
                           (nwx + 1, nwy, ax * (1 - ay)),
                           (nwx, nwy + 1, (1 - ax) * ay),
                           (nwx + 1, nwy + 1, ax * ay)]
                for cx, cy, wgt in corners:
                    if 0 <= cx < W and 0 <= cy < H:
                        out[b, :, cy, cx] += wgt * aug[b, :, y, x]
    if str_type != "summation":
        out = out[:, :-1] / (out[:, -1:] + 1e-7)
    return out


if __name__ == "__main__":
    key = jax.random.PRNGKey(0)
    k1, k2, k3 = jax.random.split(key, 3)
    B, C, H, W = 2, 4, 16, 16
    ten_input = jax.random.normal(k1, (B, C, H, W), jnp.float32)
    ten_flow = jax.random.uniform(k2, (B, 2, H, W), jnp.float32,
                                  minval=-3.0, maxval=3.0)
    ten_metric = 0.5 * jax.random.normal(k3, (B, 1, H, W), jnp.float32)

    ok = True
    for str_type in ("summation", "average", "linear", "softmax"):
        metric = None if str_type in ("summation", "average") else ten_metric
        # tile 128 -> grid (B, 2, 2): exercises dst tiling AND K accumulation.
        out = softsplat(ten_input, ten_flow, metric, str_type,
                        tile_dst=128, tile_src=128)
        out = jax.block_until_ready(out)
        ref = reference_softsplat(
            np.array(ten_input), np.array(ten_flow),
            None if metric is None else np.array(metric), str_type)
        if not np.allclose(np.array(out), ref, rtol=1e-3, atol=1e-3):
            ok = False
            print(f"MISMATCH for type={str_type}, "
                  f"max abs err={np.max(np.abs(np.array(out) - ref))}")

    if ok:
        print("KERNEL_OK")
</pallas_src>

<mosaic_0001>
module attributes {stable_mosaic.version = 11 : i64} {
  func.func @_softsplat_kernel(%arg0: i32, %arg1: i32, %arg2: i32, %arg3: memref<1x8x128xf32, #tpu.memory_space<vmem>>, %arg4: memref<1x128x2xf32, #tpu.memory_space<vmem>>, %arg5: memref<1x2x128xf32, #tpu.memory_space<vmem>>, %arg6: memref<1x8x128xf32, #tpu.memory_space<vmem>>, %arg7: memref<8x128xf32, #tpu.memory_space<vmem>>) attributes {dimension_semantics = [#tpu.dimension_semantics<parallel>, #tpu.dimension_semantics<parallel>, #tpu.dimension_semantics<arbitrary>], iteration_bounds = array<i64: 2, 2, 2>, scalar_prefetch = 0 : i64, scratch_operands = 1 : i64, tpu.core_type = #tpu.core_type<tc>, window_params = [{transform_indices = @transform_0, window_bounds = array<i64: 1, 8, 128>}, {transform_indices = @transform_1, window_bounds = array<i64: 1, 128, 2>}, {transform_indices = @transform_2, window_bounds = array<i64: 1, 2, 128>}, {transform_indices = @transform_3, window_bounds = array<i64: 1, 8, 128>}]} {
    %c0_i32 = arith.constant 0 : i32
    %0 = arith.cmpi eq, %arg2, %c0_i32 : i32
    %1 = arith.extui %0 : i1 to i32
    %c0_i32_0 = arith.constant 0 : i32
    %2 = arith.cmpi ne, %1, %c0_i32_0 : i32
    scf.if %2 {
      %cst_18 = arith.constant 0.000000e+00 : f32
      %37 = vector.broadcast %cst_18 : f32 to vector<8x128xf32>
      %c0_19 = arith.constant 0 : index
      %c0_20 = arith.constant 0 : index
      %38 = vector.load %arg7[%c0_19, %c0_20] : memref<8x128xf32, #tpu.memory_space<vmem>>, vector<8x128xf32>
      tpu.vector_store %arg7[%c0_19, %c0_20], %37 {strides = array<i32>} : memref<8x128xf32, #tpu.memory_space<vmem>>, vector<8x128xf32>,
    } else {
    }
    %c0 = arith.constant 0 : index
    %c0_1 = arith.constant 0 : index
    %c0_2 = arith.constant 0 : index
    %3 = vector.load %arg3[%c0, %c0_1, %c0_2] : memref<1x8x128xf32, #tpu.memory_space<vmem>>, vector<1x8x128xf32>
    %4 = vector.shape_cast %3 : vector<1x8x128xf32> to vector<8x128xf32>
    %c0_3 = arith.constant 0 : index
    %c0_4 = arith.constant 0 : index
    %c0_5 = arith.constant 0 : index
    %5 = vector.load %arg4[%c0_3, %c0_4, %c0_5] : memref<1x128x2xf32, #tpu.memory_space<vmem>>, vector<1x128x2xf32>
    %6 = vector.shape_cast %5 : vector<1x128x2xf32> to vector<128x2xf32>
    %7 = vector.extract_strided_slice %6 {offsets = [0, 0], sizes = [128, 1], strides = [1, 1]} : vector<128x2xf32> to vector<128x1xf32>
    %8 = vector.extract_strided_slice %6 {offsets = [0, 1], sizes = [128, 1], strides = [1, 1]} : vector<128x2xf32> to vector<128x1xf32>
    %c0_6 = arith.constant 0 : index
    %c0_7 = arith.constant 0 : index
    %c0_8 = arith.constant 0 : index
    %9 = vector.load %arg5[%c0_6, %c0_7, %c0_8] : memref<1x2x128xf32, #tpu.memory_space<vmem>>, vector<1x2x128xf32>
    %10 = vector.shape_cast %9 : vector<1x2x128xf32> to vector<2x128xf32>
    %11 = vector.extract_strided_slice %10 {offsets = [0, 0], sizes = [1, 128], strides = [1, 1]} : vector<2x128xf32> to vector<1x128xf32>
    %12 = vector.extract_strided_slice %10 {offsets = [1, 0], sizes = [1, 128], strides = [1, 1]} : vector<2x128xf32> to vector<1x128xf32>
    %13 = vector.broadcast %7 : vector<128x1xf32> to vector<128x128xf32>
    %14 = vector.broadcast %11 : vector<1x128xf32> to vector<128x128xf32>
    %15 = arith.subf %13, %14 : vector<128x128xf32>
    %16 = math.absf %15 : vector<128x128xf32>
    %cst = arith.constant 1.000000e+00 : f32
    %17 = vector.broadcast %cst : f32 to vector<128x128xf32>
    %18 = arith.subf %17, %16 : vector<128x128xf32>
    %cst_9 = arith.constant 0.000000e+00 : f32
    %19 = vector.broadcast %cst_9 : f32 to vector<128x128xf32>
    %20 = arith.maximumf %18, %19 : vector<128x128xf32>
    %21 = vector.broadcast %8 : vector<128x1xf32> to vector<128x128xf32>
    %22 = vector.broadcast %12 : vector<1x128xf32> to vector<128x128xf32>
    %23 = arith.subf %21, %22 : vector<128x128xf32>
    %24 = math.absf %23 : vector<128x128xf32>
    %cst_10 = arith.constant 1.000000e+00 : f32
    %25 = vector.broadcast %cst_10 : f32 to vector<128x128xf32>
    %26 = arith.subf %25, %24 : vector<128x128xf32>
    %cst_11 = arith.constant 0.000000e+00 : f32
    %27 = vector.broadcast %cst_11 : f32 to vector<128x128xf32>
    %28 = arith.maximumf %26, %27 : vector<128x128xf32>
    %29 = arith.mulf %20, %28 : vector<128x128xf32>
    %c0_12 = arith.constant 0 : index
    %c0_13 = arith.constant 0 : index
    %30 = vector.load %arg7[%c0_12, %c0_13] : memref<8x128xf32, #tpu.memory_space<vmem>>, vector<8x128xf32>
    %cst_14 = arith.constant dense<0.000000e+00> : vector<8x128xf32>
    %31 = tpu.matmul %4, %29, %cst_14 {dimension_numbers = #tpu.dot_dimension_numbers<[1], [0], [0], [1], [0, 0, 1, 1], [], []>} : vector<8x128xf32>, vector<128x128xf32>, vector<8x128xf32> -> vector<8x128xf32>
    %32 = arith.addf %30, %31 : vector<8x128xf32>
    %c0_15 = arith.constant 0 : index
    %c0_16 = arith.constant 0 : index
    %33 = vector.load %arg7[%c0_15, %c0_16] : memref<8x128xf32, #tpu.memory_space<vmem>>, vector<8x128xf32>
    tpu.vector_store %arg7[%c0_15, %c0_16], %32 {strides = array<i32>} : memref<8x128xf32, #tpu.memory_space<vmem>>, vector<8x128xf32>,
    %c1_i32 = arith.constant 1 : i32
    %34 = arith.cmpi eq, %arg2, %c1_i32 : i32
    %35 = arith.extui %34 : i1 to i32
    %c0_i32_17 = arith.constant 0 : i32
    %36 = arith.cmpi ne, %35, %c0_i32_17 : i32
    scf.if %36 {
      %c0_18 = arith.constant 0 : index
      %c0_19 = arith.constant 0 : index
      %37 = vector.load %arg7[%c0_18, %c0_19] : memref<8x128xf32, #tpu.memory_space<vmem>>, vector<8x128xf32>
      %c0_20 = arith.constant 0 : index
      %c0_21 = arith.constant 0 : index
      %c0_22 = arith.constant 0 : index
      %38 = vector.load %arg6[%c0_20, %c0_21, %c0_22] : memref<1x8x128xf32, #tpu.memory_space<vmem>>, vector<1x8x128xf32>
      %39 = vector.shape_cast %38 : vector<1x8x128xf32> to vector<8x128xf32>
      %40 = vector.shape_cast %37 : vector<8x128xf32> to vector<1x8x128xf32>
      tpu.vector_store %arg6[%c0_20, %c0_21, %c0_22], %40 {strides = array<i32>} : memref<1x8x128xf32, #tpu.memory_space<vmem>>, vector<1x8x128xf32>,
    } else {
    }
    return
  }
  func.func @transform_0(%arg0: i32, %arg1: i32, %arg2: i32) -> (i32, i32, i32) {
    %c0_i32 = arith.constant 0 : i32
    %c0_i32_0 = arith.constant 0 : i32
    return %arg0, %c0_i32, %arg2 : i32, i32, i32
  }
  func.func @transform_1(%arg0: i32, %arg1: i32, %arg2: i32) -> (i32, i32, i32) {
    %c0_i32 = arith.constant 0 : i32
    %c0_i32_0 = arith.constant 0 : i32
    return %arg0, %arg2, %c0_i32 : i32, i32, i32
  }
  func.func @transform_2(%arg0: i32, %arg1: i32, %arg2: i32) -> (i32, i32, i32) {
    %c0_i32 = arith.constant 0 : i32
    %c0_i32_0 = arith.constant 0 : i32
    %c0_i32_1 = arith.constant 0 : i32
    return %c0_i32, %c0_i32_0, %arg1 : i32, i32, i32
  }
  func.func @transform_3(%arg0: i32, %arg1: i32, %arg2: i32) -> (i32, i32, i32) {
    %c0_i32 = arith.constant 0 : i32
    %c0_i32_0 = arith.constant 0 : i32
    return %arg0, %c0_i32, %arg1 : i32, i32, i32
  }
}

</mosaic_0001>

<llo_original>
// kernel: tpu_custom_call.1
$region0: #{tpu_custom_call.1}
  #allocation0 [shape = 'u32[]', space=smem, size = 0x4, offset = 0x4, fixed_abs, tag = 'smem constant byte address 0x4 - core index']
  #allocation1 [shape = 'u32[144,128]{1,0:T(1,128)}', space=vmem, size = 0x12000, scoped, tag = 'internal scratch']
  #allocation2 [shape = 'f32[8,128]{1,0:T(8,128)}', space=vmem, size = 0x1000, scoped, tag = 'scratch operand']
  %s0 = inlined_call_operand.vmem [shape: f32[2,8,256], index: 0, kind: input, shape index: {}]
  %s1 = inlined_call_operand.vmem [shape: f32[2,256,2], index: 1, kind: input, shape index: {}]
  %s2 = inlined_call_operand.vmem [shape: f32[1,2,256], index: 2, kind: input, shape index: {}]
  %s3 = inlined_call_operand.hbm [shape: f32[2,8,256], index: 3, kind: output, shape index: {}]
  %s4 = sld [smem:[#allocation0]]
  $region53: #{tpu_custom_call.1} parent=0
    _
  %s6 = ssub.s32 1, %s4
  %s7 = scalar_select 0, %s6, %s4
  $region1: #{tpu_custom_call.1} parent=0
    #allocation3 [shape = 'u8[8192]{0}', space=vmem, size = 0x2000, scoped, tag = 'output window, operand 0']
    #allocation4 [shape = 's32[2]{0}', space=sflag, size = 0x8, scoped, tag = 'scoped memory for tpu_custom_call.1']
    %8 = vsyncpa [#allocation4], 0
    %s9 = scalar_lea.sflag [#allocation4], 1
    %10 = vsyncpa %s9, 0
    loop: start=0, step=1, limit=10
    $region2: #{tpu_custom_call.1} parent=1 // loop_pre_header
      _
    $region3: #{tpu_custom_call.1} parent=1 // loop_header
      %s12 = sphi 0, %s16
      %p13 = scmp.ge.s32.totalorder %s12, 10
      %s19 = sphi 0, %s38
      %s20 = sphi 0, %s34
      %s21 = sphi 0, %s30
      %s22 = sphi 0, %s19
      %s23 = sphi 0, %s20
      %s24 = sphi 0, %s21
      %s25 = sphi 0, %s22
      %s26 = sphi 0, %s23
      %s27 = sphi 0, %s24
      %s43 = sphi 0, %s45
      %s46 = sphi 0, %s43
      %s47 = sphi 0, %s46
      %s63 = sphi 0, %s47
      %s71 = sphi 0, %s73
      %s74 = sphi 0, %s71
      %s75 = sphi 0, %s74
      %s91 = sphi 0, %s75
      %s97 = sphi 0, %s99
      %s100 = sphi 0, %s97
      %s101 = sphi 0, %s100
      %s117 = sphi 0, %s101
      %s125 = sphi 0, %s127
      %s128 = sphi 0, %s125
      %s129 = sphi 0, %s128
      %s145 = sphi 0, %s129
    $region4: #{tpu_custom_call.1} parent=1 // loop_header_branch
      %15 = sbr.rel (%p13) target = $region8
    $region5: #{tpu_custom_call.1} parent=1 // loop_body
      %s17 = ssub.s32 %s12, 1
      %s18 = ssub.s32 %s12, 2
      %s28 = sadd.s32 1, %s21
      %p29 = scmp.ge.s32.totalorder %s28, 2
      %s30 = scalar_select %p29, 0, %s28
      %s31 = sadd.s32 1, %s20
      %s32 = scalar_select %p29, %s31, %s20
      %p33 = scmp.ge.s32.totalorder %s32, 2
      %s34 = scalar_select %p33, 0, %s32
      %s35 = sadd.s32 1, %s19
      %s36 = scalar_select %p33, %s35, %s19
      %p37 = scmp.ge.s32.totalorder %s36, 2
      %s38 = scalar_select %p37, 0, %s36
      %s39 = ssub.s32 %s19, %s38
      %s40 = ssub.s32 %s21, %s30
      %s41 = sor.u32 %s39, %s40
      %p42 = scmp.eq.s32.totalorder %s41, 0
      %s44 = sadd.s32 %s43, 1
      %s45 = scalar_select %p42, %s43, %s44
      %p48 = pneg %p42
      %p49 = scmp.eq.s32.totalorder %s12, 7
      %p50 = por %p48, %p49
      %p51 = scmp.ne.s32.totalorder %s43, %s46
      %p52 = scmp.eq.s32.totalorder %s12, 0
      %p53 = por %p51, %p52
      %p54 = scmp.ne.s32.totalorder %s43, %s46
      %p55 = scmp.eq.s32.totalorder %s17, 7
      %p56 = por %p54, %p55
      %p57 = scmp.ne.s32.totalorder %s46, %s47
      %p58 = scmp.eq.s32.totalorder %s17, 0
      %p59 = por %p57, %p58
      %p60 = scmp.ne.s32.totalorder %s46, %s47
      %p61 = scmp.eq.s32.totalorder %s18, 7
      %p62 = por %p60, %p61
      %p64 = scmp.ne.s32.totalorder %s47, %s63
      %p65 = scmp.eq.s32.totalorder %s18, 0
      %p66 = por %p64, %p65
      %s67 = ssub.s32 %s19, %s38
      %s68 = ssub.s32 %s21, %s30
      %s69 = sor.u32 %s67, %s68
      %p70 = scmp.eq.s32.totalorder %s69, 0
      %s72 = sadd.s32 %s71, 1
      %s73 = scalar_select %p70, %s71, %s72
      %p76 = pneg %p70
      %p77 = scmp.eq.s32.totalorder %s12, 7
      %p78 = por %p76, %p77
      %p79 = scmp.ne.s32.totalorder %s71, %s74
      %p80 = scmp.eq.s32.totalorder %s12, 0
      %p81 = por %p79, %p80
      %p82 = scmp.ne.s32.totalorder %s71, %s74
      %p83 = scmp.eq.s32.totalorder %s17, 7
      %p84 = por %p82, %p83
      %p85 = scmp.ne.s32.totalorder %s74, %s75
      %p86 = scmp.eq.s32.totalorder %s17, 0
      %p87 = por %p85, %p86
      %p88 = scmp.ne.s32.totalorder %s74, %s75
      %p89 = scmp.eq.s32.totalorder %s18, 7
      %p90 = por %p88, %p89
      %p92 = scmp.ne.s32.totalorder %s75, %s91
      %p93 = scmp.eq.s32.totalorder %s18, 0
      %p94 = por %p92, %p93
      %s95 = ssub.s32 %s20, %s34
      %p96 = scmp.eq.s32.totalorder %s95, 0
      %s98 = sadd.s32 %s97, 1
      %s99 = scalar_select %p96, %s97, %s98
      %p102 = pneg %p96
      %p103 = scmp.eq.s32.totalorder %s12, 7
      %p104 = por %p102, %p103
      %p105 = scmp.ne.s32.totalorder %s97, %s100
      %p106 = scmp.eq.s32.totalorder %s12, 0
      %p107 = por %p105, %p106
      %p108 = scmp.ne.s32.totalorder %s97, %s100
      %p109 = scmp.eq.s32.totalorder %s17, 7
      %p110 = por %p108, %p109
      %p111 = scmp.ne.s32.totalorder %s100, %s101
      %p112 = scmp.eq.s32.totalorder %s17, 0
      %p113 = por %p111, %p112
      %p114 = scmp.ne.s32.totalorder %s100, %s101
      %p115 = scmp.eq.s32.totalorder %s18, 7
      %p116 = por %p114, %p115
      %p118 = scmp.ne.s32.totalorder %s101, %s117
      %p119 = scmp.eq.s32.totalorder %s18, 0
      %p120 = por %p118, %p119
      %s121 = ssub.s32 %s19, %s38
      %s122 = ssub.s32 %s20, %s34
      %s123 = sor.u32 %s121, %s122
      %p124 = scmp.eq.s32.totalorder %s123, 0
      %s126 = sadd.s32 %s125, 1
      %s127 = scalar_select %p124, %s125, %s126
      %p130 = pneg %p124
      %p131 = scmp.eq.s32.totalorder %s12, 7
      %p132 = por %p130, %p131
      %p133 = scmp.ne.s32.totalorder %s125, %s128
      %p134 = scmp.eq.s32.totalorder %s12, 0
      %p135 = por %p133, %p134
      %p136 = scmp.ne.s32.totalorder %s125, %s128
      %p137 = scmp.eq.s32.totalorder %s17, 7
      %p138 = por %p136, %p137
      %p139 = scmp.ne.s32.totalorder %s128, %s129
      %p140 = scmp.eq.s32.totalorder %s17, 0
      %p141 = por %p139, %p140
      %p142 = scmp.ne.s32.totalorder %s128, %s129
      %p143 = scmp.eq.s32.totalorder %s18, 7
      %p144 = por %p142, %p143
      %p146 = scmp.ne.s32.totalorder %s129, %s145
      %p147 = scmp.eq.s32.totalorder %s18, 0
      %p148 = por %p146, %p147
      %p149 = scmp.le.s32.totalorder 1, %s12
      %p150 = scmp.lt.s32.totalorder %s12, 9
      %p151 = pnand %p149, %p150
      %p152 = pneg %p151
      // Predicated region
      $region9: #{tpu_custom_call.1} parent=5 // pred_check
        _
      $region10: #{tpu_custom_call.1} parent=5 // pred_check_branch
        %154 = sbr.rel (%p151) target = $region12
      $region11: #{tpu_custom_call.1} parent=5 // pred_region
        %s155 = ssub.s32 %s12, 1
      $region12: #{tpu_custom_call.1} parent=5 // pred_fallthru
        _
      %p156 = scmp.lt.s32.totalorder %s12, 8
      // Predicated region
      $region13: #{tpu_custom_call.1} parent=5 // pred_check
        %p157 = pneg %p156
      $region14: #{tpu_custom_call.1} parent=5 // pred_check_branch
        %159 = sbr.rel (%p157) target = $region16
      $region15: #{tpu_custom_call.1} parent=5 // pred_region
        // Predicated region
        $region17: #{tpu_custom_call.1} parent=15 // pred_check
          %p160 = pneg %p53
        $region18: #{tpu_custom_call.1} parent=15 // pred_check_branch
          %162 = sbr.rel (%p160) target = $region20
        $region19: #{tpu_custom_call.1} parent=15 // pred_region
          %p163 = scmp.lt.s32.totalorder %s19, 1
          %s164 = scalar_select %p163, %s19, 1
          %p165 = scmp.lt.s32.totalorder %s21, 1
          %s166 = scalar_select %p165, %s21, 1
          %s167 = smul.addr %s164, 2
          %s168 = sadd.s32 %s166, %s167
          %s169 = smul.addr %s168, 8
          %s170 = scalar_lea.vmem %s0, %s169
        $region20: #{tpu_custom_call.1} parent=15 // pred_fallthru
          _
        // Predicated region
        $region21: #{tpu_custom_call.1} parent=15 // pred_check
          %p171 = pneg %p81
        $region22: #{tpu_custom_call.1} parent=15 // pred_check_branch
          %173 = sbr.rel (%p171) target = $region24
        $region23: #{tpu_custom_call.1} parent=15 // pred_region
          %s174 = smul.u32 16, %s21
          %p175 = scmp.lt.s32.totalorder %s19, 1
          %s176 = scalar_select %p175, %s19, 1
          %p177 = scmp.lt.s32.totalorder %s174, 31
          %s178 = scalar_select %p177, %s174, 31
          %s179 = smul.addr %s176, 32
          %s180 = sadd.s32 %s178, %s179
          %s181 = smul.addr %s180, 8
          %s182 = scalar_lea.vmem %s1, %s181
          %s183 = smul.u32 16, %s21
        $region24: #{tpu_custom_call.1} parent=15 // pred_fallthru
          _
        // Predicated region
        $region25: #{tpu_custom_call.1} parent=15 // pred_check
          %p184 = pneg %p107
        $region26: #{tpu_custom_call.1} parent=15 // pred_check_branch
          %186 = sbr.rel (%p184) target = $region28
        $region27: #{tpu_custom_call.1} parent=15 // pred_region
          %p187 = scmp.lt.s32.totalorder %s20, 1
          %s188 = scalar_select %p187, %s20, 1
          %s189 = smul.addr %s188, 2
          %s190 = scalar_lea.vmem %s2, %s189
        $region28: #{tpu_custom_call.1} parent=15 // pred_fallthru
          _
      $region16: #{tpu_custom_call.1} parent=5 // pred_fallthru
        _
      %p191 = scmp.le.s32.totalorder 1, %s12
      %p192 = scmp.lt.s32.totalorder %s12, 9
      %p193 = pnand %p191, %p192
      %p194 = pneg %p193
      // Predicated region
      $region29: #{tpu_custom_call.1} parent=5 // pred_check
        _
      $region30: #{tpu_custom_call.1} parent=5 // pred_check_branch
        %196 = sbr.rel (%p193) target = $region32
      $region31: #{tpu_custom_call.1} parent=5 // pred_region
        %s197 = ssub.s32 %s12, 1
        %p198 = scmp.lt.s32.totalorder %s22, 1
        %s199 = scalar_select %p198, %s22, 1
        %p200 = scmp.lt.s32.totalorder %s24, 1
        %s201 = scalar_select %p200, %s24, 1
        %s202 = smul.addr %s199, 2
        %s203 = sadd.s32 %s201, %s202
        %s204 = smul.addr %s203, 8
        %s205 = scalar_lea.vmem %s0, %s204
        %p206 = pneg %p59
        %p207 = pneg %p56
        %s208 = smul.u32 16, %s24
        %p209 = scmp.lt.s32.totalorder %s22, 1
        %s210 = scalar_select %p209, %s22, 1
        %p211 = scmp.lt.s32.totalorder %s208, 31
        %s212 = scalar_select %p211, %s208, 31
        %s213 = smul.addr %s210, 32
        %s214 = sadd.s32 %s212, %s213
        %s215 = smul.addr %s214, 8
        %s216 = scalar_lea.vmem %s1, %s215
        %p217 = pneg %p87
        %p218 = pneg %p84
        %p219 = scmp.lt.s32.totalorder %s23, 1
        %s220 = scalar_select %p219, %s23, 1
        %s221 = smul.addr %s220, 2
        %s222 = scalar_lea.vmem %s2, %s221
        %p223 = pneg %p113
        %p224 = pneg %p110
        %p225 = pneg %p141
        %p226 = pneg %p138
        %s227 = sand.u32 %s128, 1
        %s228 = scalar_lea.sflag [#allocation4], %s227
        %s229 = sand.u32 %s128, 1
        %s230 = smul.addr %s229, 8
        %s231 = scalar_lea.vmem [#allocation3], %s230
        %p232 = scmp.lt.s32.totalorder %s22, 1
        %s233 = scalar_select %p232, %s22, 1
        %p234 = scmp.lt.s32.totalorder %s24, 1
        %s235 = scalar_select %p234, %s24, 1
        %s236 = smul.addr %s233, 2
        %s237 = sadd.s32 %s235, %s236
        %s238 = smul.addr %s237, 8
        %s239 = scalar_lea.vmem %s0, %s238
        %s240 = smul.u32 16, %s24
        %p241 = scmp.lt.s32.totalorder %s22, 1
        %s242 = scalar_select %p241, %s22, 1
        %p243 = scmp.lt.s32.totalorder %s240, 31
        %s244 = scalar_select %p243, %s240, 31
        %s245 = smul.addr %s242, 32
        %s246 = sadd.s32 %s244, %s245
        %s247 = smul.addr %s246, 8
        %s248 = scalar_lea.vmem %s1, %s247
        %s249 = smul.u32 16, %s24
        %p250 = scmp.lt.s32.totalorder %s23, 1
        %s251 = scalar_select %p250, %s23, 1
        %s252 = smul.addr %s251, 2
        %s253 = scalar_lea.vmem %s2, %s252
        %p254 = scmp.eq.s32.totalorder %s24, 0
        // Predicated region
        $region33: #{tpu_custom_call.1} parent=31 // pred_check
          %p255 = pneg %p254
        $region34: #{tpu_custom_call.1} parent=31 // pred_check_branch
          %257 = sbr.rel (%p255) target = $region36
        $region35: #{tpu_custom_call.1} parent=31 // pred_region
          %258 = vst [vmem:[#allocation2] sm:$0xff] 0.0
        $region36: #{tpu_custom_call.1} parent=31 // pred_fallthru
          _
        %v259 = vld [vmem:[%s239] sm:$0xff]
        %v260 = vld [vmem:[%s248] sm:$0xff]
        %v261 = vld [vmem:[%s248 + $0x8] sm:$0xff]
        %v262 = vld [vmem:[%s248 + $0x10] sm:$0xff]
        %v263 = vld [vmem:[%s248 + $0x18] sm:$0xff]
        %v264 = vld [vmem:[%s248 + $0x20] sm:$0xff]
        %v265 = vld [vmem:[%s248 + $0x28] sm:$0xff]
        %v266 = vld [vmem:[%s248 + $0x30] sm:$0xff]
        %v267 = vld [vmem:[%s248 + $0x38] sm:$0xff]
        %v268 = vld [vmem:[%s248 + $0x40] sm:$0xff]
        %v269 = vld [vmem:[%s248 + $0x48] sm:$0xff]
        %v270 = vld [vmem:[%s248 + $0x50] sm:$0xff]
        %v271 = vld [vmem:[%s248 + $0x58] sm:$0xff]
        %v272 = vld [vmem:[%s248 + $0x60] sm:$0xff]
        %v273 = vld [vmem:[%s248 + $0x68] sm:$0xff]
        %v274 = vld [vmem:[%s248 + $0x70] sm:$0xff]
        %v275 = vld [vmem:[%s248 + $0x78] sm:$0xff]
        %v276 = vld [vmem:[%s253] sm:$0x3]
        %278 = vset.pattern.permute.xlu0 0
        %279 = vperm.xlu0 %278, %v260
        %v280 = vpop.permute.xlu0 %279
        %283 = vset.pattern.permute.xlu0 0
        %284 = vperm.xlu0 %283, %v261
        %v285 = vpop.permute.xlu0 %284
        %288 = vset.pattern.permute.xlu0 0
        %289 = vperm.xlu0 %288, %v262
        %v290 = vpop.permute.xlu0 %289
        %293 = vset.pattern.permute.xlu0 0
        %294 = vperm.xlu0 %293, %v263
        %v295 = vpop.permute.xlu0 %294
        %298 = vset.pattern.permute.xlu0 0
        %299 = vperm.xlu0 %298, %v264
        %v300 = vpop.permute.xlu0 %299
        %303 = vset.pattern.permute.xlu0 0
        %304 = vperm.xlu0 %303, %v265
        %v305 = vpop.permute.xlu0 %304
        %308 = vset.pattern.permute.xlu0 0
        %309 = vperm.xlu0 %308, %v266
        %v310 = vpop.permute.xlu0 %309
        %313 = vset.pattern.permute.xlu0 0
        %314 = vperm.xlu0 %313, %v267
        %v315 = vpop.permute.xlu0 %314
        %318 = vset.pattern.permute.xlu0 0
        %319 = vperm.xlu0 %318, %v268
        %v320 = vpop.permute.xlu0 %319
        %323 = vset.pattern.permute.xlu0 0
        %324 = vperm.xlu0 %323, %v269
        %v325 = vpop.permute.xlu0 %324
        %328 = vset.pattern.permute.xlu0 0
        %329 = vperm.xlu0 %328, %v270
        %v330 = vpop.permute.xlu0 %329
        %333 = vset.pattern.permute.xlu0 0
        %334 = vperm.xlu0 %333, %v271
        %v335 = vpop.permute.xlu0 %334
        %338 = vset.pattern.permute.xlu0 0
        %339 = vperm.xlu0 %338, %v272
        %v340 = vpop.permute.xlu0 %339
        %343 = vset.pattern.permute.xlu0 0
        %344 = vperm.xlu0 %343, %v273
        %v345 = vpop.permute.xlu0 %344
        %348 = vset.pattern.permute.xlu0 0
        %349 = vperm.xlu0 %348, %v274
        %v350 = vpop.permute.xlu0 %349
        %353 = vset.pattern.permute.xlu0 0
        %354 = vperm.xlu0 %353, %v275
        %v355 = vpop.permute.xlu0 %354
        %v357 = vlaneseq
        %v358 = vshrl.u32 %v357, 7
        %v359 = vsub.s32 0, %v358
        %v360 = vrot.slane %v276, %v359
        %v361 = vsub.f32 %v280, %v360
        %v362 = vsub.f32 %v285, %v360
        %v363 = vsub.f32 %v290, %v360
        %v364 = vsub.f32 %v295, %v360
        %v365 = vsub.f32 %v300, %v360
        %v366 = vsub.f32 %v305, %v360
        %v367 = vsub.f32 %v310, %v360
        %v368 = vsub.f32 %v315, %v360
        %v369 = vsub.f32 %v320, %v360
        %v370 = vsub.f32 %v325, %v360
        %v371 = vsub.f32 %v330, %v360
        %v372 = vsub.f32 %v335, %v360
        %v373 = vsub.f32 %v340, %v360
        %v374 = vsub.f32 %v345, %v360
        %v375 = vsub.f32 %v350, %v360
        %v376 = vsub.f32 %v355, %v360
        %v377 = vand.u32 2147483647, %v361
        %v378 = vand.u32 2147483647, %v362
        %v379 = vand.u32 2147483647, %v363
        %v380 = vand.u32 2147483647, %v364
        %v381 = vand.u32 2147483647, %v365
        %v382 = vand.u32 2147483647, %v366
        %v383 = vand.u32 2147483647, %v367
        %v384 = vand.u32 2147483647, %v368
        %v385 = vand.u32 2147483647, %v369
        %v386 = vand.u32 2147483647, %v370
        %v387 = vand.u32 2147483647, %v371
        %v388 = vand.u32 2147483647, %v372
        %v389 = vand.u32 2147483647, %v373
        %v390 = vand.u32 2147483647, %v374
        %v391 = vand.u32 2147483647, %v375
        %v392 = vand.u32 2147483647, %v376
        %v393 = vsub.f32 1.0, %v377
        %v394 = vsub.f32 1.0, %v378
        %v395 = vsub.f32 1.0, %v379
        %v396 = vsub.f32 1.0, %v380
        %v397 = vsub.f32 1.0, %v381
        %v398 = vsub.f32 1.0, %v382
        %v399 = vsub.f32 1.0, %v383
        %v400 = vsub.f32 1.0, %v384
        %v401 = vsub.f32 1.0, %v385
        %v402 = vsub.f32 1.0, %v386
        %v403 = vsub.f32 1.0, %v387
        %v404 = vsub.f32 1.0, %v388
        %v405 = vsub.f32 1.0, %v389
        %v406 = vsub.f32 1.0, %v390
        %v407 = vsub.f32 1.0, %v391
        %v408 = vsub.f32 1.0, %v392
        %v409 = vmax.f32 %v393, 0.0
        %v410 = vmax.f32 %v394, 0.0
        %v411 = vmax.f32 %v395, 0.0
        %v412 = vmax.f32 %v396, 0.0
        %v413 = vmax.f32 %v397, 0.0
        %v414 = vmax.f32 %v398, 0.0
        %v415 = vmax.f32 %v399, 0.0
        %v416 = vmax.f32 %v400, 0.0
        %v417 = vmax.f32 %v401, 0.0
        %v418 = vmax.f32 %v402, 0.0
        %v419 = vmax.f32 %v403, 0.0
        %v420 = vmax.f32 %v404, 0.0
        %v421 = vmax.f32 %v405, 0.0
        %v422 = vmax.f32 %v406, 0.0
        %v423 = vmax.f32 %v407, 0.0
        %v424 = vmax.f32 %v408, 0.0
        %425 = vset.pattern.permute.xlu0 1
        %426 = vperm.xlu0 %425, %v260
        %v427 = vpop.permute.xlu0 %426
        %429 = vset.pattern.permute.xlu0 1
        %430 = vperm.xlu0 %429, %v261
        %v431 = vpop.permute.xlu0 %430
        %433 = vset.pattern.permute.xlu0 1
        %434 = vperm.xlu0 %433, %v262
        %v435 = vpop.permute.xlu0 %434
        %437 = vset.pattern.permute.xlu0 1
        %438 = vperm.xlu0 %437, %v263
        %v439 = vpop.permute.xlu0 %438
        %441 = vset.pattern.permute.xlu0 1
        %442 = vperm.xlu0 %441, %v264
        %v443 = vpop.permute.xlu0 %442
        %445 = vset.pattern.permute.xlu0 1
        %446 = vperm.xlu0 %445, %v265
        %v447 = vpop.permute.xlu0 %446
        %449 = vset.pattern.permute.xlu0 1
        %450 = vperm.xlu0 %449, %v266
        %v451 = vpop.permute.xlu0 %450
        %453 = vset.pattern.permute.xlu0 1
        %454 = vperm.xlu0 %453, %v267
        %v455 = vpop.permute.xlu0 %454
        %457 = vset.pattern.permute.xlu0 1
        %458 = vperm.xlu0 %457, %v268
        %v459 = vpop.permute.xlu0 %458
        %461 = vset.pattern.permute.xlu0 1
        %462 = vperm.xlu0 %461, %v269
        %v463 = vpop.permute.xlu0 %462
        %465 = vset.pattern.permute.xlu0 1
        %466 = vperm.xlu0 %465, %v270
        %v467 = vpop.permute.xlu0 %466
        %469 = vset.pattern.permute.xlu0 1
        %470 = vperm.xlu0 %469, %v271
        %v471 = vpop.permute.xlu0 %470
        %473 = vset.pattern.permute.xlu0 1
        %474 = vperm.xlu0 %473, %v272
        %v475 = vpop.permute.xlu0 %474
        %477 = vset.pattern.permute.xlu0 1
        %478 = vperm.xlu0 %477, %v273
        %v479 = vpop.permute.xlu0 %478
        %481 = vset.pattern.permute.xlu0 1
        %482 = vperm.xlu0 %481, %v274
        %v483 = vpop.permute.xlu0 %482
        %485 = vset.pattern.permute.xlu0 1
        %486 = vperm.xlu0 %485, %v275
        %v487 = vpop.permute.xlu0 %486
        %v489 = vlaneseq
        %v490 = vshrl.u32 %v489, 7
        %v491 = vsub.s32 1, %v490
        %v492 = vrot.slane %v276, %v491
        %v493 = vsub.f32 %v427, %v492
        %v494 = vsub.f32 %v431, %v492
        %v495 = vsub.f32 %v435, %v492
        %v496 = vsub.f32 %v439, %v492
        %v497 = vsub.f32 %v443, %v492
        %v498 = vsub.f32 %v447, %v492
        %v499 = vsub.f32 %v451, %v492
        %v500 = vsub.f32 %v455, %v492
        %v501 = vsub.f32 %v459, %v492
        %v502 = vsub.f32 %v463, %v492
        %v503 = vsub.f32 %v467, %v492
        %v504 = vsub.f32 %v471, %v492
        %v505 = vsub.f32 %v475, %v492
        %v506 = vsub.f32 %v479, %v492
        %v507 = vsub.f32 %v483, %v492
        %v508 = vsub.f32 %v487, %v492
        %v509 = vand.u32 2147483647, %v493
        %v510 = vand.u32 2147483647, %v494
        %v511 = vand.u32 2147483647, %v495
        %v512 = vand.u32 2147483647, %v496
        %v513 = vand.u32 2147483647, %v497
        %v514 = vand.u32 2147483647, %v498
        %v515 = vand.u32 2147483647, %v499
        %v516 = vand.u32 2147483647, %v500
        %v517 = vand.u32 2147483647, %v501
        %v518 = vand.u32 2147483647, %v502
        %v519 = vand.u32 2147483647, %v503
        %v520 = vand.u32 2147483647, %v504
        %v521 = vand.u32 2147483647, %v505
        %v522 = vand.u32 2147483647, %v506
        %v523 = vand.u32 2147483647, %v507
        %v524 = vand.u32 2147483647, %v508
        %v525 = vsub.f32 1.0, %v509
        %v526 = vsub.f32 1.0, %v510
        %v527 = vsub.f32 1.0, %v511
        %v528 = vsub.f32 1.0, %v512
        %v529 = vsub.f32 1.0, %v513
        %v530 = vsub.f32 1.0, %v514
        %v531 = vsub.f32 1.0, %v515
        %v532 = vsub.f32 1.0, %v516
        %v533 = vsub.f32 1.0, %v517
        %v534 = vsub.f32 1.0, %v518
        %v535 = vsub.f32 1.0, %v519
        %v536 = vsub.f32 1.0, %v520
        %v537 = vsub.f32 1.0, %v521
        %v538 = vsub.f32 1.0, %v522
        %v539 = vsub.f32 1.0, %v523
        %v540 = vsub.f32 1.0, %v524
        %v541 = vmax.f32 %v525, 0.0
        %v542 = vmax.f32 %v526, 0.0
        %v543 = vmax.f32 %v527, 0.0
        %v544 = vmax.f32 %v528, 0.0
        %v545 = vmax.f32 %v529, 0.0
        %v546 = vmax.f32 %v530, 0.0
        %v547 = vmax.f32 %v531, 0.0
        %v548 = vmax.f32 %v532, 0.0
        %v549 = vmax.f32 %v533, 0.0
        %v550 = vmax.f32 %v534, 0.0
        %v551 = vmax.f32 %v535, 0.0
        %v552 = vmax.f32 %v536, 0.0
        %v553 = vmax.f32 %v537, 0.0
        %v554 = vmax.f32 %v538, 0.0
        %v555 = vmax.f32 %v539, 0.0
        %v556 = vmax.f32 %v540, 0.0
        %v557 = vmul.f32 %v409, %v541
        %v558 = vmul.f32 %v410, %v542
        %v559 = vmul.f32 %v411, %v543
        %v560 = vmul.f32 %v412, %v544
        %v561 = vmul.f32 %v413, %v545
        %v562 = vmul.f32 %v414, %v546
        %v563 = vmul.f32 %v415, %v547
        %v564 = vmul.f32 %v416, %v548
        %v565 = vmul.f32 %v417, %v549
        %v566 = vmul.f32 %v418, %v550
        %v567 = vmul.f32 %v419, %v551
        %v568 = vmul.f32 %v420, %v552
        %v569 = vmul.f32 %v421, %v553
        %v570 = vmul.f32 %v422, %v554
        %v571 = vmul.f32 %v423, %v555
        %v572 = vmul.f32 %v424, %v556
        %v573 = vld [vmem:[#allocation2] sm:$0xff]
        %574 = vmatprep.subr.mxu0 0.0
        %575 = vmatpush1.msra.mxu0 %v557
        %576 = vmatprep.subr.mxu0 0.0
        %577 = vmatpush1.msra.mxu0 %v558
        %578 = vmatprep.subr.mxu0 0.0
        %579 = vmatpush1.msra.mxu0 %v559
        %580 = vmatprep.subr.mxu0 0.0
        %581 = vmatpush1.msra.mxu0 %v560
        %582 = vmatprep.subr.mxu0 0.0
        %583 = vmatpush1.msra.mxu0 %v561
        %584 = vmatprep.subr.mxu0 0.0
        %585 = vmatpush1.msra.mxu0 %v562
        %586 = vmatprep.subr.mxu0 0.0
        %587 = vmatpush1.msra.mxu0 %v563
        %588 = vmatprep.subr.mxu0 0.0
        %589 = vmatpush1.msra.mxu0 %v564
        %590 = vmatprep.subr.mxu0 0.0
        %591 = vmatpush1.msra.mxu0 %v565
        %592 = vmatprep.subr.mxu0 0.0
        %593 = vmatpush1.msra.mxu0 %v566
        %594 = vmatprep.subr.mxu0 0.0
        %595 = vmatpush1.msra.mxu0 %v567
        %596 = vmatprep.subr.mxu0 0.0
        %597 = vmatpush1.msra.mxu0 %v568
        %598 = vmatprep.subr.mxu0 0.0
        %599 = vmatpush1.msra.mxu0 %v569
        %600 = vmatprep.subr.mxu0 0.0
        %601 = vmatpush1.msra.mxu0 %v570
        %602 = vmatprep.subr.mxu0 0.0
        %603 = vmatpush1.msra.mxu0 %v571
        %604 = vmatprep.subr.mxu0 0.0
        %605 = vmatpush1.msra.mxu0 %v572
        %606 = vmatprep.subr.mxu0 0.0
        %607 = vmatpush1.msra.mxu0 0.0
        %608 = vmatprep.subr.mxu0 0.0
        %609 = vmatpush1.msra.mxu0 0.0
        %610 = vmatprep.subr.mxu0 0.0
        %611 = vmatpush1.msra.mxu0 0.0
        %612 = vmatprep.subr.mxu0 0.0
        %613 = vmatpush1.msra.mxu0 0.0
        %614 = vmatprep.subr.mxu0 0.0
        %615 = vmatpush1.msra.mxu0 0.0
        %616 = vmatprep.subr.mxu0 0.0
        %617 = vmatpush1.msra.mxu0 0.0
        %618 = vmatprep.subr.mxu0 0.0
        %619 = vmatpush1.msra.mxu0 0.0
        %620 = vmatprep.subr.mxu0 0.0
        %621 = vmatpush1.msra.mxu0 0.0
        %622 = vmatprep.subr.mxu0 0.0
        %623 = vmatpush1.msra.mxu0 0.0
        %624 = vmatprep.subr.mxu0 0.0
        %625 = vmatpush1.msra.mxu0 0.0
        %626 = vmatprep.subr.mxu0 0.0
        %627 = vmatpush1.msra.mxu0 0.0
        %628 = vmatprep.subr.mxu0 0.0
        %629 = vmatpush1.msra.mxu0 0.0
        %630 = vmatprep.subr.mxu0 0.0
        %631 = vmatpush1.msra.mxu0 0.0
        %632 = vmatprep.subr.mxu0 0.0
        %633 = vmatpush1.msra.mxu0 0.0
        %634 = vmatprep.subr.mxu0 0.0
        %635 = vmatpush1.msra.mxu0 0.0
        %636 = vmatprep.subr.mxu0 0.0
        %637 = vmatpush1.msra.mxu0 0.0
        %638 = vmatprep.mubr.f32.mxu0 0.0
        %639 = vmatmul.mubr.f32.gmra.mrb[0].mxu0 %v259
        %v640 = vpop.f32.mrb[0].mxu0
        %v641 = vadd.f32 0.0, %v640
        %v642 = vpop.f32.mrb[0].mxu0
        %643 = vdwg.mxu0
        %v644 = vadd.f32 %v573, %v641
        %645 = vst [vmem:[#allocation2] sm:$0xff] %v644
        %p646 = scmp.eq.s32.totalorder %s24, 1
        // Predicated region
        $region37: #{tpu_custom_call.1} parent=31 // pred_check
          %p647 = pneg %p646
        $region38: #{tpu_custom_call.1} parent=31 // pred_check_branch
          %649 = sbr.rel (%p647) target = $region40
        $region39: #{tpu_custom_call.1} parent=31 // pred_region
          %v650 = vld [vmem:[#allocation2] sm:$0xff]
          %651 = vst [vmem:[%s231] sm:$0xff] %v650
        $region40: #{tpu_custom_call.1} parent=31 // pred_fallthru
          _
        %s652 = sand.u32 %s128, 1
        %s653 = scalar_lea.sflag [#allocation4], %s652
        %s654 = sand.u32 %s128, 1
        %s655 = smul.addr %s654, 8
        %s656 = scalar_lea.vmem [#allocation3], %s655
        // Predicated region
        $region41: #{tpu_custom_call.1} parent=31 // pred_check
          %p657 = pneg %p138
        $region42: #{tpu_custom_call.1} parent=31 // pred_check_branch
          %659 = sbr.rel (%p657) target = $region44
        $region43: #{tpu_custom_call.1} parent=31 // pred_region
          %s661 = ssub.s32 128, 128
          %662 = vsyncadd %s653, %s661
          %s663 = smul.addr %s22, 2
          %s664 = sadd.s32 %s23, %s663
          %s665 = smul.addr %s664, 128
          %s666 = scalar_lea.hbm %s3, %s665
          %s668 = sshll.u32 %s656, 4
          %s669 = int_to_ptr.vmem [resolvable:$true] %s668
          %671 = dma.vmem_to_hbm [thread:$0]  %s669, 128, %s666, %s653
        $region44: #{tpu_custom_call.1} parent=31 // pred_fallthru
          _
      $region32: #{tpu_custom_call.1} parent=5 // pred_fallthru
        _
      %p672 = scmp.le.s32.totalorder 2, %s12
      // Predicated region
      $region45: #{tpu_custom_call.1} parent=5 // pred_check
        %p673 = pneg %p672
      $region46: #{tpu_custom_call.1} parent=5 // pred_check_branch
        %675 = sbr.rel (%p673) target = $region48
      $region47: #{tpu_custom_call.1} parent=5 // pred_region
        %s676 = ssub.s32 %s12, 2
        // Predicated region
        $region49: #{tpu_custom_call.1} parent=47 // pred_check
          %p677 = pneg %p144
        $region50: #{tpu_custom_call.1} parent=47 // pred_check_branch
          %679 = sbr.rel (%p677) target = $region52
        $region51: #{tpu_custom_call.1} parent=47 // pred_region
          %s680 = sand.u32 %s129, 1
          %s681 = scalar_lea.sflag [#allocation4], %s680
          %s682 = sand.u32 %s129, 1
          %s683 = smul.addr %s682, 8
          %s684 = scalar_lea.vmem [#allocation3], %s683
          %685 = dma.done %s681, 128
        $region52: #{tpu_custom_call.1} parent=47 // pred_fallthru
          _
      $region48: #{tpu_custom_call.1} parent=5 // pred_fallthru
        _
    $region6: #{tpu_custom_call.1} parent=1 // loop_footer
      %s16 = sadd.s32 1, %s12
    $region7: #{tpu_custom_call.1} parent=1 // loop_footer_branch
      %11 = sbr.rel target = $region3
    $region8: #{tpu_custom_call.1} parent=1 // loop_exit
      _
    %686 = vsyncpa [#allocation4], 1
    %s687 = scalar_lea.sflag [#allocation4], 1
    %688 = vsyncpa %s687, 1

</llo_original>
